<compile_context>
chip_gen: v6e
topology: v6e:2x2x1
jax: 0.10.0
libtpu: 0.0.40
codegen_flags: <defaults>
</compile_context>

<pallas_src>
import functools
import math

import jax
import jax.numpy as jnp
from jax.experimental import pallas as pl
from jax.experimental.pallas import tpu as pltpu


# -----------------------------------------------------------------------------
# helpers
# -----------------------------------------------------------------------------
def _round_up(x, m):
    return ((x + m - 1) // m) * m


def _pick_time_chunk(T, Bp, Hp, *, budget_bytes=48 * 2**20, max_unroll=16):
    """Largest time chunk whose double-buffered bf16 G/y streams + W_hh scratch fit the budget."""
    fixed = 8 * Hp * Hp + 48 * Bp * Hp          # W_hh scratch (bf16) + state/io buffers (approx)
    per_step = 20 * Bp * Hp                     # 2x (G chunk + y chunk) bf16 bytes per timestep
    avail = budget_bytes - fixed
    tc = int(avail // per_step) if avail > per_step else 1
    return max(1, min(tc, max_unroll, T))


# -----------------------------------------------------------------------------
# Generic tiled linear kernel: (N, K) @ (K, Vp) + bias -> (N, Vp)
# Used for both the hoisted LSTM input projection (bf16 out) and the decoder (f32 out).
# Grid is (vocab tiles OUTER, row tiles INNER) so the weight tile is streamed once.
# -----------------------------------------------------------------------------
def _linear_kernel(x_ref, w_ref, b_ref, o_ref):
    acc = jnp.dot(x_ref[...], w_ref[...], preferred_element_type=jnp.float32)
    o_ref[...] = (acc + b_ref[...]).astype(o_ref.dtype)


def linear_pallas(x, w, b, *, out_dtype=jnp.float32, x_resident_budget=8 * 2**20):
    """x: (N, K) bf16, w: (K, Vp) bf16 with Vp % 128 == 0, b: (1, Vp) f32 -> (N, Vp) out_dtype."""
    x = x.astype(jnp.bfloat16)
    N, K = x.shape
    Kw, Vp = w.shape
    assert K == Kw and Vp % 128 == 0

    # Lane-dense output tile width (multiple of 128, prefer wide for the MXU).
    tn = 128
    for cand in (512, 256, 128):
        if Vp % cand == 0:
            tn = cand
            break

    # Row tile: keep the whole activation resident when it fits (weight streamed once,
    # activation DMA'd once); otherwise tile rows with minimal padding waste.
    n_pad8 = _round_up(N, 8)
    if n_pad8 * K * 2 <= x_resident_budget:
        tm = n_pad8
    else:
        tm = 128
    n_pad = _round_up(n_pad8, tm)
    if n_pad != N:
        x = jnp.pad(x, ((0, n_pad - N), (0, 0)))

    out_el = jnp.dtype(out_dtype).itemsize
    vmem_need = (2 * tm * K * 2          # x tile (double-buffered worst case)
                 + 2 * K * tn * 2        # weight tile
                 + 2 * tn * 4            # bias tile
                 + 2 * tm * tn * out_el)  # output tile
    vmem_limit = int(min(max(vmem_need + 8 * 2**20, 32 * 2**20), 120 * 2**20))

    out = pl.pallas_call(
        _linear_kernel,
        out_shape=jax.ShapeDtypeStruct((n_pad, Vp), out_dtype),
        grid=(Vp // tn, n_pad // tm),                 # vocab OUTER: weight streamed once
        in_specs=[
            pl.BlockSpec((tm, K), lambda j, i: (i, 0)),
            pl.BlockSpec((K, tn), lambda j, i: (0, j)),
            pl.BlockSpec((1, tn), lambda j, i: (0, j)),
        ],
        out_specs=pl.BlockSpec((tm, tn), lambda j, i: (i, j)),
        compiler_params=pltpu.CompilerParams(
            dimension_semantics=("parallel", "parallel"),
            vmem_limit_bytes=vmem_limit),
    )(x, w, b)
    return out[:N]


# -----------------------------------------------------------------------------
# LSTM recurrence kernel (input projection already hoisted out):
#   gates_t = G[t] + h @ W_hh^T          (G precomputed = x W_ih^T + b_ih + b_hh, bf16)
#   i,f,o = sigmoid ; g = tanh ; c' = f*c + i*g ; h' = o*tanh(c')
# Grid iterates over time chunks of Tc steps; h/c carried as fori_loop values inside a
# chunk and in VMEM scratch across chunks.  W_hh lives in a single-buffered VMEM scratch
# (copied once from HBM at t == 0).  Tail (padded) timesteps are masked.
# -----------------------------------------------------------------------------
def _lstm_recurrence_kernel(g_ref, h0_ref, c0_ref, whh_hbm,
                            y_ref, hT_ref, cT_ref,
                            h_scr, c_scr, whh_scr, dma_sem,
                            *, hp, tc, t_actual, needs_mask):
    t = pl.program_id(0)

    @pl.when(t == 0)
    def _init():
        cp = pltpu.make_async_copy(whh_hbm, whh_scr, dma_sem)   # W_hh: one DMA, single buffer
        cp.start()
        cp.wait()
        h_scr[...] = h0_ref[...]
        c_scr[...] = c0_ref[...]

    def step(tt, carry):
        h, c = carry
        gates = g_ref[tt].astype(jnp.float32) + jnp.dot(
            h.astype(jnp.bfloat16), whh_scr[...],
            preferred_element_type=jnp.float32)                 # (Bp, 4Hp) f32
        i_g = jax.nn.sigmoid(gates[:, 0 * hp:1 * hp])           # lane-aligned gate slices
        f_g = jax.nn.sigmoid(gates[:, 1 * hp:2 * hp])
        g_g = jnp.tanh(gates[:, 2 * hp:3 * hp])
        o_g = jax.nn.sigmoid(gates[:, 3 * hp:4 * hp])
        c_new = f_g * c + i_g * g_g
        h_new = o_g * jnp.tanh(c_new)
        y_ref[tt] = h_new.astype(y_ref.dtype)                   # bf16 store (padded tail sliced off)
        if needs_mask:
            valid = (t * tc + tt) < t_actual
            h_new = jnp.where(valid, h_new, h)
            c_new = jnp.where(valid, c_new, c)
        return h_new, c_new

    h_fin, c_fin = jax.lax.fori_loop(0, tc, step, (h_scr[...], c_scr[...]),
                                     unroll=True)
    h_scr[...] = h_fin
    c_scr[...] = c_fin

    @pl.when(t == pl.num_programs(0) - 1)
    def _finalize():
        hT_ref[...] = h_scr[...]
        cT_ref[...] = c_scr[...]


def lstm_recurrence(g, h0, c0, whh_t, *, t_actual, tc):
    """g: (T_pad, Bp, 4Hp) bf16 precomputed gate inputs, h0/c0: (Bp, Hp) f32,
    whh_t: (Hp, 4Hp) bf16 (gate blocks lane-aligned).  t_actual = real T (<= T_pad)."""
    T_pad, Bp, G4 = g.shape
    Hp = whh_t.shape[0]
    assert G4 == 4 * Hp and T_pad % tc == 0

    needs_mask = (T_pad != t_actual)
    kernel = functools.partial(_lstm_recurrence_kernel, hp=Hp, tc=tc,
                               t_actual=t_actual, needs_mask=needs_mask)

    # VMEM accounting -> compiler limit with headroom (covers v5e's 16 MiB default).
    vmem_need = (2 * tc * Bp * G4 * 2      # G chunk (bf16, double-buffered)
                 + 2 * tc * Bp * Hp * 2    # y chunk (bf16, double-buffered)
                 + Hp * G4 * 2             # W_hh scratch (single-buffered)
                 + 12 * Bp * Hp * 4)       # h0/c0/hT/cT buffers + h/c scratch (f32)
    vmem_limit = int(min(max(vmem_need + 8 * 2**20, 32 * 2**20), 120 * 2**20))

    y, hT, cT = pl.pallas_call(
        kernel,
        out_shape=(
            jax.ShapeDtypeStruct((T_pad, Bp, Hp), jnp.bfloat16),
            jax.ShapeDtypeStruct((Bp, Hp), jnp.float32),
            jax.ShapeDtypeStruct((Bp, Hp), jnp.float32),
        ),
        grid=(T_pad // tc,),
        in_specs=[
            pl.BlockSpec((tc, Bp, G4), lambda t: (t, 0, 0)),   # precomputed gates chunk
            pl.BlockSpec((Bp, Hp), lambda t: (0, 0)),          # h0
            pl.BlockSpec((Bp, Hp), lambda t: (0, 0)),          # c0
            pl.BlockSpec(memory_space=pl.ANY),                 # W_hh^T stays in HBM; copied once
        ],
        out_specs=(
            pl.BlockSpec((tc, Bp, Hp), lambda t: (t, 0, 0)),   # y chunk
            pl.BlockSpec((Bp, Hp), lambda t: (0, 0)),          # h_T
            pl.BlockSpec((Bp, Hp), lambda t: (0, 0)),          # c_T
        ),
        scratch_shapes=[
            pltpu.VMEM((Bp, Hp), jnp.float32),                 # h carry
            pltpu.VMEM((Bp, Hp), jnp.float32),                 # c carry
            pltpu.VMEM((Hp, G4), jnp.bfloat16),                # single-buffered W_hh^T
            pltpu.SemaphoreType.DMA,                           # W_hh copy semaphore
        ],
        compiler_params=pltpu.CompilerParams(
            dimension_semantics=("arbitrary",),                # sequential recurrence
            vmem_limit_bytes=vmem_limit),
    )(g, h0, c0, whh_t)
    return y, hT, cT


# -----------------------------------------------------------------------------
# Parameter packing: torch layout -> padded / transposed / bf16 device layout.
# Gate blocks (i, f, g, o) are each padded to Hp columns so slices are lane-aligned.
# -----------------------------------------------------------------------------
def _pack_gate_weight(w, H, Hp, in_actual, in_padded):
    # w: (4H, in_actual) torch layout -> (in_padded, 4*Hp) bf16, zero-padded.
    w4 = w.reshape(4, H, in_actual)
    w4 = jnp.pad(w4, ((0, 0), (0, Hp - H), (0, in_padded - in_actual)))
    return jnp.transpose(w4, (2, 0, 1)).reshape(in_padded, 4 * Hp).astype(jnp.bfloat16)


def _pack_gate_bias(b_ih, b_hh, H, Hp):
    b = (b_ih + b_hh).reshape(4, H)
    b = jnp.pad(b, ((0, 0), (0, Hp - H)))
    return b.reshape(1, 4 * Hp).astype(jnp.float32)


def pack_params(params):
    H, V, ninp = params["nhid"], params["ntoken"], params["ninp"]
    Hp = _round_up(H, 128)
    Vp = _round_up(V, 128)
    layers = []
    for l, lp in enumerate(params["lstm"]):
        in_actual = ninp if l == 0 else H
        in_padded = ninp if l == 0 else Hp
        layers.append({
            "wih_t": _pack_gate_weight(lp["w_ih"], H, Hp, in_actual, in_padded),
            "whh_t": _pack_gate_weight(lp["w_hh"], H, Hp, H, Hp),
            "bias": _pack_gate_bias(lp["b_ih"], lp["b_hh"], H, Hp),
        })
    dec_wt = jnp.pad(jnp.transpose(params["decoder_weight"]),
                     ((0, Hp - H), (0, Vp - V))).astype(jnp.bfloat16)       # (Hp, Vp)
    dec_b = jnp.pad(params["decoder_bias"], (0, Vp - V)).reshape(1, Vp).astype(jnp.float32)
    return {
        "encoder_weight": params["encoder_weight"],
        "layers": layers,
        "decoder_wt": dec_wt,
        "decoder_b": dec_b,
    }


# -----------------------------------------------------------------------------
# Full RNNModel forward
# -----------------------------------------------------------------------------
def rnn_model_forward(tokens, hidden, packed, *, nhid, ntoken):
    """tokens: (T, B) int32; hidden: (h0, c0) each (nlayers, B, nhid)."""
    h0_all, c0_all = hidden
    T, B = tokens.shape
    H, V = nhid, ntoken
    Hp = _round_up(H, 128)
    Bp = _round_up(B, 8)
    Vp = _round_up(V, 128)
    nlayers = len(packed["layers"])

    Tc = _pick_time_chunk(T, Bp, Hp)
    T_pad = _round_up(T, Tc)

    # Embedding gather (glue, plain JAX). Dropout = identity (eval mode).
    # Activation stream carried in bf16; padded timesteps/batch rows are zero.
    emb = packed["encoder_weight"][tokens].astype(jnp.bfloat16)          # (T, B, ninp)
    x = jnp.pad(emb, ((0, T_pad - T), (0, Bp - B), (0, 0)))              # (T_pad, Bp, ninp)

    h_finals, c_finals = [], []
    for l in range(nlayers):
        lp = packed["layers"][l]
        in_dim = x.shape[-1]
        # Hoisted input projection: ONE batched matmul for all timesteps (bf16 out).
        g = linear_pallas(x.reshape(T_pad * Bp, in_dim), lp["wih_t"], lp["bias"],
                          out_dtype=jnp.bfloat16)
        g = g.reshape(T_pad, Bp, 4 * Hp)
        h0 = jnp.pad(h0_all[l], ((0, Bp - B), (0, Hp - H)))
        c0 = jnp.pad(c0_all[l], ((0, Bp - B), (0, Hp - H)))
        y, hT, cT = lstm_recurrence(g, h0, c0, lp["whh_t"], t_actual=T, tc=Tc)
        h_finals.append(hT[:B, :H])
        c_finals.append(cT[:B, :H])
        x = y                                                            # (T_pad, Bp, Hp) bf16

    # Decoder: drop padded timesteps before the big vocab matmul, logits in f32.
    dec_in = x[:T].reshape(T * Bp, Hp)
    decoded = linear_pallas(dec_in, packed["decoder_wt"], packed["decoder_b"],
                            out_dtype=jnp.float32)                       # (T*Bp, Vp)
    decoded = decoded.reshape(T, Bp, Vp)[:, :B, :V]
    return decoded, (jnp.stack(h_finals, 0), jnp.stack(c_finals, 0))


# -----------------------------------------------------------------------------
# Deterministic parameter init (mirrors RNNModel.__init__ / init_weights)
# -----------------------------------------------------------------------------
def init_params(key, ntoken, ninp, nhid, nlayers):
    keys = jax.random.split(key, 2 + 4 * nlayers)
    initrange = 0.1
    params = {
        "ntoken": ntoken, "ninp": ninp, "nhid": nhid, "nlayers": nlayers,
        "encoder_weight": jax.random.uniform(keys[0], (ntoken, ninp),
                                             jnp.float32, -initrange, initrange),
        "decoder_weight": jax.random.uniform(keys[1], (ntoken, nhid),
                                             jnp.float32, -initrange, initrange),
        "decoder_bias": jnp.zeros((ntoken,), jnp.float32),
        "lstm": [],
    }
    stdv = 1.0 / math.sqrt(nhid)
    for layer in range(nlayers):
        in_size = ninp if layer == 0 else nhid
        k = keys[2 + 4 * layer: 2 + 4 * (layer + 1)]
        params["lstm"].append({
            "w_ih": jax.random.uniform(k[0], (4 * nhid, in_size), jnp.float32, -stdv, stdv),
            "w_hh": jax.random.uniform(k[1], (4 * nhid, nhid), jnp.float32, -stdv, stdv),
            "b_ih": jax.random.uniform(k[2], (4 * nhid,), jnp.float32, -stdv, stdv),
            "b_hh": jax.random.uniform(k[3], (4 * nhid,), jnp.float32, -stdv, stdv),
        })
    return params


if __name__ == "__main__":
    ntoken, ninp, nhid, nlayers = 64, 32, 32, 2
    T, B = 8, 2

    key = jax.random.PRNGKey(0)
    pkey, tkey = jax.random.split(key)
    params = init_params(pkey, ntoken, ninp, nhid, nlayers)
    packed = pack_params(params)

    tokens = jax.random.randint(tkey, (T, B), 0, ntoken, dtype=jnp.int32)
    # init_hidden(bsz): zeros for (h0, c0)
    h0 = jnp.zeros((nlayers, B, nhid), jnp.float32)
    c0 = jnp.zeros((nlayers, B, nhid), jnp.float32)

    decoded, (h_n, c_n) = rnn_model_forward(tokens, (h0, c0), packed,
                                            nhid=nhid, ntoken=ntoken)
    jax.block_until_ready((decoded, h_n, c_n))

    assert decoded.shape == (T, B, ntoken)
    assert h_n.shape == (nlayers, B, nhid) and c_n.shape == (nlayers, B, nhid)
    print("KERNEL_OK")
</pallas_src>

<mosaic_0001>
module attributes {stable_mosaic.version = 11 : i64} {
  func.func @_linear_kernel(%arg0: i32, %arg1: i32, %arg2: memref<64x32xbf16, #tpu.memory_space<vmem>>, %arg3: memref<32x512xbf16, #tpu.memory_space<vmem>>, %arg4: memref<1x512xf32, #tpu.memory_space<vmem>>, %arg5: memref<64x512xbf16, #tpu.memory_space<vmem>>) attributes {dimension_semantics = [#tpu.dimension_semantics<parallel>, #tpu.dimension_semantics<parallel>], iteration_bounds = array<i64: 1, 1>, scalar_prefetch = 0 : i64, scratch_operands = 0 : i64, tpu.core_type = #tpu.core_type<tc>, window_params = [{transform_indices = @transform_0, window_bounds = array<i64: 64, 32>}, {transform_indices = @transform_1, window_bounds = array<i64: 32, 512>}, {transform_indices = @transform_2, window_bounds = array<i64: 1, 512>}, {transform_indices = @transform_3, window_bounds = array<i64: 64, 512>}]} {
    %c0 = arith.constant 0 : index
    %c0_0 = arith.constant 0 : index
    %0 = vector.load %arg2[%c0, %c0_0] : memref<64x32xbf16, #tpu.memory_space<vmem>>, vector<64x32xbf16>
    %c0_1 = arith.constant 0 : index
    %c0_2 = arith.constant 0 : index
    %1 = vector.load %arg3[%c0_1, %c0_2] : memref<32x512xbf16, #tpu.memory_space<vmem>>, vector<32x512xbf16>
    %cst = arith.constant dense<0.000000e+00> : vector<64x512xf32>
    %2 = tpu.matmul %0, %1, %cst {dimension_numbers = #tpu.dot_dimension_numbers<[1], [0], [0], [1], [0, 0, 1, 1], [], []>} : vector<64x32xbf16>, vector<32x512xbf16>, vector<64x512xf32> -> vector<64x512xf32>
    %c0_3 = arith.constant 0 : index
    %c0_4 = arith.constant 0 : index
    %3 = vector.load %arg4[%c0_3, %c0_4] : memref<1x512xf32, #tpu.memory_space<vmem>>, vector<1x512xf32>
    %4 = vector.broadcast %3 : vector<1x512xf32> to vector<64x512xf32>
    %5 = arith.addf %2, %4 : vector<64x512xf32>
    %6 = arith.truncf %5 : vector<64x512xf32> to vector<64x512xbf16>
    %c0_5 = arith.constant 0 : index
    %c0_6 = arith.constant 0 : index
    %7 = vector.load %arg5[%c0_5, %c0_6] : memref<64x512xbf16, #tpu.memory_space<vmem>>, vector<64x512xbf16>
    tpu.vector_store %arg5[%c0_5, %c0_6], %6 {strides = array<i32>} : memref<64x512xbf16, #tpu.memory_space<vmem>>, vector<64x512xbf16>,
    return
  }
  func.func @transform_0(%arg0: i32, %arg1: i32) -> (i32, i32) {
    %c0_i32 = arith.constant 0 : i32
    %c0_i32_0 = arith.constant 0 : i32
    return %arg1, %c0_i32 : i32, i32
  }
  func.func @transform_1(%arg0: i32, %arg1: i32) -> (i32, i32) {
    %c0_i32 = arith.constant 0 : i32
    %c0_i32_0 = arith.constant 0 : i32
    return %c0_i32, %arg0 : i32, i32
  }
  func.func @transform_2(%arg0: i32, %arg1: i32) -> (i32, i32) {
    %c0_i32 = arith.constant 0 : i32
    %c0_i32_0 = arith.constant 0 : i32
    return %c0_i32, %arg0 : i32, i32
  }
  func.func @transform_3(%arg0: i32, %arg1: i32) -> (i32, i32) {
    %c0_i32 = arith.constant 0 : i32
    return %arg1, %arg0 : i32, i32
  }
}

</mosaic_0001>

<llo_original>
// kernel: tpu_custom_call.1
$region0: #{tpu_custom_call.1}
  #allocation0 [shape = 'u32[]', space=smem, size = 0x4, offset = 0x4, fixed_abs, tag = 'smem constant byte address 0x4 - core index']
  #allocation1 [shape = 'u32[144,128]{1,0:T(1,128)}', space=vmem, size = 0x12000, scoped, tag = 'internal scratch']
  %s0 = inlined_call_operand.vmem [shape: bf16[64,32], index: 0, kind: input, shape index: {}]
  %s1 = inlined_call_operand.hbm [shape: bf16[32,512], index: 1, kind: input, shape index: {}]
  %s2 = inlined_call_operand.vmem [shape: f32[1,512], index: 2, kind: input, shape index: {}]
  %s3 = inlined_call_operand.hbm [shape: bf16[64,512], index: 3, kind: output, shape index: {}]
  %s4 = sld [smem:[#allocation0]]
  $region26: #{tpu_custom_call.1} parent=0
    _
  %s6 = ssub.s32 1, %s4
  %s7 = scalar_select 0, %s6, %s4
  $region1: #{tpu_custom_call.1} parent=0
    #allocation2 [shape = 'u8[32768]{0}', space=vmem, size = 0x8000, scoped, tag = 'input window, operand 1, single buffered']
    #allocation3 [shape = 's32[1]{0}', space=sflag, size = 0x4, scoped, tag = 'scoped memory for tpu_custom_call.1']
    #allocation4 [shape = 's32[1]{0}', space=sflag, size = 0x4, scoped, tag = 'scoped memory for tpu_custom_call.1']
    #allocation5 [shape = 'u8[65536]{0}', space=vmem, size = 0x10000, scoped, tag = 'output window, operand 0, single buffered']
    %8 = vsyncpa [#allocation3], 0
    %9 = vsyncpa [#allocation4], 0
    // Predicated region
    $region2: #{tpu_custom_call.1} parent=1 // pred_check
      _
    $region3: #{tpu_custom_call.1} parent=1 // pred_check_branch
      %11 = sbr.rel (0) target = $region5
    $region4: #{tpu_custom_call.1} parent=1 // pred_region
      _
    $region5: #{tpu_custom_call.1} parent=1 // pred_fallthru
      _
    // Predicated region
    $region6: #{tpu_custom_call.1} parent=1 // pred_check
      _
    $region7: #{tpu_custom_call.1} parent=1 // pred_check_branch
      %13 = sbr.rel (0) target = $region9
    $region8: #{tpu_custom_call.1} parent=1 // pred_region
      %s15 = ssub.s32 1024, 1024
      %16 = vsyncadd [#allocation3], %s15
      %s17 = sshll.u32 [#allocation2], 4
      %s18 = int_to_ptr.vmem [resolvable:$true] %s17
      %23 = dma.hbm_to_vmem [thread:$0]  %s1, 1024, %s18, [#allocation3], 256, 256, 16
    $region9: #{tpu_custom_call.1} parent=1 // pred_fallthru
      _
    // Predicated region
    $region10: #{tpu_custom_call.1} parent=1 // pred_check
      _
    $region11: #{tpu_custom_call.1} parent=1 // pred_check_branch
      %25 = sbr.rel (0) target = $region13
    $region12: #{tpu_custom_call.1} parent=1 // pred_region
      _
    $region13: #{tpu_custom_call.1} parent=1 // pred_fallthru
      _
    // Predicated region
    $region14: #{tpu_custom_call.1} parent=1 // pred_check
      _
    $region15: #{tpu_custom_call.1} parent=1 // pred_check_branch
      %27 = sbr.rel (0) target = $region17
    $region16: #{tpu_custom_call.1} parent=1 // pred_region
      %28 = dma.done [#allocation3], 1024
    $region17: #{tpu_custom_call.1} parent=1 // pred_fallthru
      _
    %v30 = vld [vmem:[%s0] sm:$0xf]
    %v31 = vld [vmem:[%s0 + $0x4] sm:$0xf]
    %v32 = vld [vmem:[%s0 + $0x8] sm:$0xf]
    %v33 = vld [vmem:[%s0 + $0xc] sm:$0xf]
    %v34 = vld [vmem:[%s0 + $0x10] sm:$0xf]
    %v35 = vld [vmem:[%s0 + $0x14] sm:$0xf]
    %v36 = vld [vmem:[%s0 + $0x18] sm:$0xf]
    %v37 = vld [vmem:[%s0 + $0x1c] sm:$0xf]
    %v38 = vld [vmem:[#allocation2] sm:$0xff]
    %v39 = vld [vmem:[#allocation2 + $0x8] sm:$0xff]
    %v40 = vld [vmem:[#allocation2 + $0x10] sm:$0xff]
    %v41 = vld [vmem:[#allocation2 + $0x18] sm:$0xff]
    %v42 = vld [vmem:[#allocation2 + $0x20] sm:$0xff]
    %v43 = vld [vmem:[#allocation2 + $0x28] sm:$0xff]
    %v44 = vld [vmem:[#allocation2 + $0x30] sm:$0xff]
    %v45 = vld [vmem:[#allocation2 + $0x38] sm:$0xff]
    %v46 = vld [vmem:[%s2] sm:$0xf]
    %v48 = vlaneseq
    %v49 = vshrl.u32 %v48, 7
    %v50 = vsub.s32 0, %v49
    %v51 = vrot.slane %v46, %v50
    %v52 = vlaneseq
    %v53 = vshrl.u32 %v52, 7
    %v54 = vsub.s32 1, %v53
    %v55 = vrot.slane %v46, %v54
    %v56 = vlaneseq
    %v57 = vshrl.u32 %v56, 7
    %v58 = vsub.s32 2, %v57
    %v59 = vrot.slane %v46, %v58
    %v60 = vlaneseq
    %v61 = vshrl.u32 %v60, 7
    %v62 = vsub.s32 3, %v61
    %v63 = vrot.slane %v46, %v62
    %v76 = vunpack.c.l.b16 %v30
    %v77 = vunpack.c.l.b16 %v31
    %v78 = vunpack.c.l.b16 %v32
    %v79 = vunpack.c.l.b16 %v33
    %v80 = vunpack.c.l.b16 %v34
    %v81 = vunpack.c.l.b16 %v35
    %v82 = vunpack.c.l.b16 %v36
    %v83 = vunpack.c.l.b16 %v37
    %v84 = vpack.c.b16 %v77, %v76
    %v85 = vpack.c.b16 %v79, %v78
    %v86 = vpack.c.b16 %v81, %v80
    %v87 = vpack.c.b16 %v83, %v82
    %v96 = vunpack.c.l.b16 %v38
    %v97 = vunpack.c.h.b16 %v38
    %v98 = vunpack.c.l.b16 %v39
    %v99 = vunpack.c.h.b16 %v39
    %v100 = vunpack.c.l.b16 %v40
    %v101 = vunpack.c.h.b16 %v40
    %v102 = vunpack.c.l.b16 %v41
    %v103 = vunpack.c.h.b16 %v41
    %v104 = vunpack.c.l.b16 %v42
    %v105 = vunpack.c.h.b16 %v42
    %v106 = vunpack.c.l.b16 %v43
    %v107 = vunpack.c.h.b16 %v43
    %v108 = vunpack.c.l.b16 %v44
    %v109 = vunpack.c.h.b16 %v44
    %v110 = vunpack.c.l.b16 %v45
    %v111 = vunpack.c.h.b16 %v45
    %v112 = vpack.c.b16 %v100, %v96
    %v113 = vpack.c.b16 %v101, %v97
    %v114 = vpack.c.b16 %v102, %v98
    %v115 = vpack.c.b16 %v103, %v99
    %v116 = vpack.c.b16 %v108, %v104
    %v117 = vpack.c.b16 %v109, %v105
    %v118 = vpack.c.b16 %v110, %v106
    %v119 = vpack.c.b16 %v111, %v107
    %vm128 = vcmask 261120
    %v130 = vsel %vm128, %v84, 0
    %v133 = vsel %vm128, %v85, 0
    %v136 = vsel %vm128, %v86, 0
    %v139 = vsel %vm128, %v87, 0
    %141 = vmatprep.subr.bf16.mxu0 0
    %142 = vmatpush1.bf16.msra.mxu0 0
    %143 = vmatprep.subr.bf16.mxu0 0
    %144 = vmatpush1.bf16.msra.mxu0 0
    %145 = vmatprep.subr.bf16.mxu0 0
    %146 = vmatpush1.bf16.msra.mxu0 0
    %147 = vmatprep.subr.bf16.mxu0 0
    %148 = vmatpush1.bf16.msra.mxu0 0
    %149 = vmatprep.subr.bf16.mxu0 0
    %150 = vmatpush1.bf16.msra.mxu0 0
    %151 = vmatprep.subr.bf16.mxu0 0
    %152 = vmatpush1.bf16.msra.mxu0 0
    %153 = vmatprep.subr.bf16.mxu0 %v117
    %154 = vmatpush1.bf16.msra.mxu0 %v116
    %155 = vmatprep.subr.bf16.mxu0 %v113
    %156 = vmatpush1.bf16.msra.mxu0 %v112
    %157 = vmatprep.subr.bf16.mxu0 0
    %158 = vmatpush2.bf16.msra.mxu0 0
    %159 = vmatprep.subr.bf16.mxu0 0
    %160 = vmatpush2.bf16.msra.mxu0 0
    %161 = vmatprep.subr.bf16.mxu0 0
    %162 = vmatpush2.bf16.msra.mxu0 0
    %163 = vmatprep.subr.bf16.mxu0 0
    %164 = vmatpush2.bf16.msra.mxu0 0
    %165 = vmatprep.subr.bf16.mxu0 0
    %166 = vmatpush2.bf16.msra.mxu0 0
    %167 = vmatprep.subr.bf16.mxu0 0
    %168 = vmatpush2.bf16.msra.mxu0 0
    %169 = vmatprep.subr.bf16.mxu0 0
    %170 = vmatpush2.bf16.msra.mxu0 0
    %171 = vmatprep.subr.bf16.mxu0 0
    %172 = vmatpush2.bf16.msra.mxu0 0
    %173 = vmatprep.mubr.bf16.mxu0 0
    %174 = vmatmul.mubr.bf16.gmra.mxu0 %v130
    %v175 = vpop.f32.mrf.mxu0
    %v176 = vadd.f32 %v51, %v175
    %v177 = vpop.f32.mrf.mxu0
    %v178 = vadd.f32 %v55, %v177
    %v179 = vpop.f32.mrf.mxu0
    %v180 = vadd.f32 %v51, %v179
    %v181 = vpop.f32.mrf.mxu0
    %v182 = vadd.f32 %v55, %v181
    %183 = vmatprep.mubr.bf16.mxu0 0
    %184 = vmatmul.mubr.bf16.gmra.mxu0 %v133
    %v185 = vpop.f32.mrf.mxu0
    %v186 = vadd.f32 %v51, %v185
    %v187 = vpop.f32.mrf.mxu0
    %v188 = vadd.f32 %v55, %v187
    %v189 = vpop.f32.mrf.mxu0
    %v190 = vadd.f32 %v51, %v189
    %v191 = vpop.f32.mrf.mxu0
    %v192 = vadd.f32 %v55, %v191
    %193 = vmatprep.mubr.bf16.mxu0 0
    %194 = vmatmul.mubr.bf16.gmra.mxu0 %v136
    %v195 = vpop.f32.mrf.mxu0
    %v196 = vadd.f32 %v51, %v195
    %v197 = vpop.f32.mrf.mxu0
    %v198 = vadd.f32 %v55, %v197
    %v199 = vpop.f32.mrf.mxu0
    %v200 = vadd.f32 %v51, %v199
    %v201 = vpop.f32.mrf.mxu0
    %v202 = vadd.f32 %v55, %v201
    %203 = vmatprep.mubr.bf16.mxu0 0
    %204 = vmatmul.mubr.bf16.gmra.mxu0 %v139
    %v205 = vpop.f32.mrf.mxu0
    %v206 = vadd.f32 %v51, %v205
    %v207 = vpop.f32.mrf.mxu0
    %v208 = vadd.f32 %v55, %v207
    %v209 = vpop.f32.mrf.mxu0
    %v210 = vadd.f32 %v51, %v209
    %v211 = vpop.f32.mrf.mxu0
    %v212 = vadd.f32 %v55, %v211
    %213 = vdwg.mxu0
    %214 = vmatprep.subr.bf16.mxu0 0
    %215 = vmatpush1.bf16.msra.mxu0 0
    %216 = vmatprep.subr.bf16.mxu0 0
    %217 = vmatpush1.bf16.msra.mxu0 0
    %218 = vmatprep.subr.bf16.mxu0 0
    %219 = vmatpush1.bf16.msra.mxu0 0
    %220 = vmatprep.subr.bf16.mxu0 0
    %221 = vmatpush1.bf16.msra.mxu0 0
    %222 = vmatprep.subr.bf16.mxu0 0
    %223 = vmatpush1.bf16.msra.mxu0 0
    %224 = vmatprep.subr.bf16.mxu0 0
    %225 = vmatpush1.bf16.msra.mxu0 0
    %226 = vmatprep.subr.bf16.mxu0 %v119
    %227 = vmatpush1.bf16.msra.mxu0 %v118
    %228 = vmatprep.subr.bf16.mxu0 %v115
    %229 = vmatpush1.bf16.msra.mxu0 %v114
    %230 = vmatprep.subr.bf16.mxu0 0
    %231 = vmatpush2.bf16.msra.mxu0 0
    %232 = vmatprep.subr.bf16.mxu0 0
    %233 = vmatpush2.bf16.msra.mxu0 0
    %234 = vmatprep.subr.bf16.mxu0 0
    %235 = vmatpush2.bf16.msra.mxu0 0
    %236 = vmatprep.subr.bf16.mxu0 0
    %237 = vmatpush2.bf16.msra.mxu0 0
    %238 = vmatprep.subr.bf16.mxu0 0
    %239 = vmatpush2.bf16.msra.mxu0 0
    %240 = vmatprep.subr.bf16.mxu0 0
    %241 = vmatpush2.bf16.msra.mxu0 0
    %242 = vmatprep.subr.bf16.mxu0 0
    %243 = vmatpush2.bf16.msra.mxu0 0
    %244 = vmatprep.subr.bf16.mxu0 0
    %245 = vmatpush2.bf16.msra.mxu0 0
    %246 = vmatprep.mubr.bf16.mxu0 0
    %247 = vmatmul.mubr.bf16.gmra.mxu0 %v130
    %v248 = vpop.f32.mrf.mxu0
    %v249 = vadd.f32 %v59, %v248
    %v250 = vpop.f32.mrf.mxu0
    %v251 = vadd.f32 %v63, %v250
    %v252 = vpop.f32.mrf.mxu0
    %v253 = vadd.f32 %v59, %v252
    %v254 = vpop.f32.mrf.mxu0
    %v255 = vadd.f32 %v63, %v254
    %256 = vmatprep.mubr.bf16.mxu0 0
    %257 = vmatmul.mubr.bf16.gmra.mxu0 %v133
    %v258 = vpop.f32.mrf.mxu0
    %v259 = vadd.f32 %v59, %v258
    %v260 = vpop.f32.mrf.mxu0
    %v261 = vadd.f32 %v63, %v260
    %v262 = vpop.f32.mrf.mxu0
    %v263 = vadd.f32 %v59, %v262
    %v264 = vpop.f32.mrf.mxu0
    %v265 = vadd.f32 %v63, %v264
    %266 = vmatprep.mubr.bf16.mxu0 0
    %267 = vmatmul.mubr.bf16.gmra.mxu0 %v136
    %v268 = vpop.f32.mrf.mxu0
    %v269 = vadd.f32 %v59, %v268
    %v270 = vpop.f32.mrf.mxu0
    %v271 = vadd.f32 %v63, %v270
    %v272 = vpop.f32.mrf.mxu0
    %v273 = vadd.f32 %v59, %v272
    %v274 = vpop.f32.mrf.mxu0
    %v275 = vadd.f32 %v63, %v274
    %276 = vmatprep.mubr.bf16.mxu0 0
    %277 = vmatmul.mubr.bf16.gmra.mxu0 %v139
    %v278 = vpop.f32.mrf.mxu0
    %v279 = vadd.f32 %v59, %v278
    %v280 = vpop.f32.mrf.mxu0
    %v281 = vadd.f32 %v63, %v280
    %v282 = vpop.f32.mrf.mxu0
    %v283 = vadd.f32 %v59, %v282
    %v284 = vpop.f32.mrf.mxu0
    %v285 = vadd.f32 %v63, %v284
    %286 = vdwg.mxu0
    %v287 = vpack.c.bf16 %v180, %v176
    %v288 = vpack.c.bf16 %v182, %v178
    %v289 = vpack.c.bf16 %v253, %v249
    %v290 = vpack.c.bf16 %v255, %v251
    %v291 = vpack.c.bf16 %v190, %v186
    %v292 = vpack.c.bf16 %v192, %v188
    %v293 = vpack.c.bf16 %v263, %v259
    %v294 = vpack.c.bf16 %v265, %v261
    %v295 = vpack.c.bf16 %v200, %v196
    %v296 = vpack.c.bf16 %v202, %v198
    %v297 = vpack.c.bf16 %v273, %v269
    %v298 = vpack.c.bf16 %v275, %v271
    %v299 = vpack.c.bf16 %v210, %v206
    %v300 = vpack.c.bf16 %v212, %v208
    %v301 = vpack.c.bf16 %v283, %v279
    %v302 = vpack.c.bf16 %v285, %v281
    %v319 = vunpack.c.l.b16 %v287
    %v320 = vunpack.c.l.b16 %v288
    %v321 = vunpack.c.l.b16 %v289
    %v322 = vunpack.c.l.b16 %v290
    %v323 = vunpack.c.h.b16 %v287
    %v324 = vunpack.c.h.b16 %v288
    %v325 = vunpack.c.h.b16 %v289
    %v326 = vunpack.c.h.b16 %v290
    %v327 = vunpack.c.l.b16 %v291
    %v328 = vunpack.c.l.b16 %v292
    %v329 = vunpack.c.l.b16 %v293
    %v330 = vunpack.c.l.b16 %v294
    %v331 = vunpack.c.h.b16 %v291
    %v332 = vunpack.c.h.b16 %v292
    %v333 = vunpack.c.h.b16 %v293
    %v334 = vunpack.c.h.b16 %v294
    %v335 = vunpack.c.l.b16 %v295
    %v336 = vunpack.c.l.b16 %v296
    %v337 = vunpack.c.l.b16 %v297
    %v338 = vunpack.c.l.b16 %v298
    %v339 = vunpack.c.h.b16 %v295
    %v340 = vunpack.c.h.b16 %v296
    %v341 = vunpack.c.h.b16 %v297
    %v342 = vunpack.c.h.b16 %v298
    %v343 = vunpack.c.l.b16 %v299
    %v344 = vunpack.c.l.b16 %v300
    %v345 = vunpack.c.l.b16 %v301
    %v346 = vunpack.c.l.b16 %v302
    %v347 = vunpack.c.h.b16 %v299
    %v348 = vunpack.c.h.b16 %v300
    %v349 = vunpack.c.h.b16 %v301
    %v350 = vunpack.c.h.b16 %v302
    %v351 = vpack.c.b16 %v320, %v319
    %v352 = vpack.c.b16 %v322, %v321
    %v353 = vpack.c.b16 %v324, %v323
    %v354 = vpack.c.b16 %v326, %v325
    %v355 = vpack.c.b16 %v328, %v327
    %v356 = vpack.c.b16 %v330, %v329
    %v357 = vpack.c.b16 %v332, %v331
    %v358 = vpack.c.b16 %v334, %v333
    %v359 = vpack.c.b16 %v336, %v335
    %v360 = vpack.c.b16 %v338, %v337
    %v361 = vpack.c.b16 %v340, %v339
    %v362 = vpack.c.b16 %v342, %v341
    %v363 = vpack.c.b16 %v344, %v343
    %v364 = vpack.c.b16 %v346, %v345
    %v365 = vpack.c.b16 %v348, %v347
    %v366 = vpack.c.b16 %v350, %v349
    %383 = vst [vmem:[#allocation5] sm:$0xff] %v351
    %384 = vst [vmem:[#allocation5 + $0x8] sm:$0xff] %v352
    %385 = vst [vmem:[#allocation5 + $0x10] sm:$0xff] %v353
    %386 = vst [vmem:[#allocation5 + $0x18] sm:$0xff] %v354
    %387 = vst [vmem:[#allocation5 + $0x20] sm:$0xff] %v355
    %388 = vst [vmem:[#allocation5 + $0x28] sm:$0xff] %v356
    %389 = vst [vmem:[#allocation5 + $0x30] sm:$0xff] %v357
    %390 = vst [vmem:[#allocation5 + $0x38] sm:$0xff] %v358
    %391 = vst [vmem:[#allocation5 + $0x40] sm:$0xff] %v359
    %392 = vst [vmem:[#allocation5 + $0x48] sm:$0xff] %v360
    %393 = vst [vmem:[#allocation5 + $0x50] sm:$0xff] %v361
    %394 = vst [vmem:[#allocation5 + $0x58] sm:$0xff] %v362
    %395 = vst [vmem:[#allocation5 + $0x60] sm:$0xff] %v363
    %396 = vst [vmem:[#allocation5 + $0x68] sm:$0xff] %v364
    %397 = vst [vmem:[#allocation5 + $0x70] sm:$0xff] %v365
    %398 = vst [vmem:[#allocation5 + $0x78] sm:$0xff] %v366
    // Predicated region
    $region18: #{tpu_custom_call.1} parent=1 // pred_check
      _
    $region19: #{tpu_custom_call.1} parent=1 // pred_check_branch
      %400 = sbr.rel (0) target = $region21
    $region20: #{tpu_custom_call.1} parent=1 // pred_region
      %s402 = ssub.s32 2048, 2048
      %403 = vsyncadd [#allocation4], %s402
      %s404 = sshll.u32 [#allocation5], 4
      %s405 = int_to_ptr.vmem [resolvable:$true] %s404
      %410 = dma.vmem_to_hbm [thread:$0]  %s405, 2048, %s3, [#allocation4], 256, 256, 16
    $region21: #{tpu_custom_call.1} parent=1 // pred_fallthru
      _
    // Predicated region
    $region22: #{tpu_custom_call.1} parent=1 // pred_check
      _
    $region23: #{tpu_custom_call.1} parent=1 // pred_check_branch
      %412 = sbr.rel (0) target = $region25
    $region24: #{tpu_custom_call.1} parent=1 // pred_region
      %413 = dma.done [#allocation4], 2048
    $region25: #{tpu_custom_call.1} parent=1 // pred_fallthru
      _
    %414 = vsyncpa [#allocation3], 1
    %415 = vsyncpa [#allocation4], 1

</llo_original>
